<compile_context>
chip_gen: v6e
topology: v6e:2x2x1
jax: 0.10.0
libtpu: 0.0.40
codegen_flags: <defaults>
</compile_context>

<pallas_src>
import jax
import jax.numpy as jnp
from jax.experimental import pallas as pl
from jax.experimental.pallas import tpu as pltpu


def dgi_kernel(xcat_ref, adj_ref, w_ref, gb2_ref, wbt_ref, alpha_ref, bb_ref,
               out_ref):
    # Per-grid-step: one graph in the batch.
    xcat = xcat_ref[0]          # (2N, F) bf16 : [x1 ; x2] stacked on node axis
    adj = adj_ref[0]            # (N, N)  bf16
    w = w_ref[...]              # (F, H)  bf16
    gb2 = gb2_ref[...]          # (1, 2H) f32  : [gcn_bias | gcn_bias]
    wbt = wbt_ref[...]          # (H, H)  f32  : bilinear weight, transposed
    alpha = alpha_ref[0, 0]     # PReLU slope (SMEM scalar)
    bb = bb_ref[0, 0]           # bilinear bias (SMEM scalar)

    n = adj.shape[0]
    h = w.shape[1]

    # ---- fused feature transform: one (2N,F)x(F,H) MXU matmul, f32 accumulate
    z = jnp.dot(xcat, w, preferred_element_type=jnp.float32)          # (2N, H)

    # ---- re-pack the two branches along the hidden (lane) axis -> (N, 2H)
    z12 = jnp.concatenate([z[:n], z[n:]], axis=1).astype(jnp.bfloat16)

    # ---- fused propagation: one (N,N)x(N,2H) MXU matmul, f32 accumulate
    pre = jnp.dot(adj, z12, preferred_element_type=jnp.float32) + gb2  # (N, 2H)
    h12 = jnp.where(pre > 0, pre, alpha * pre)                         # PReLU, f32

    h1 = h12[:, :h]                                                    # (N, H)
    h2 = h12[:, h:]                                                    # (N, H)

    # ---- readout + sigmoid (f32)
    s = jax.nn.sigmoid(jnp.mean(h1, axis=0, keepdims=True))            # (1, H)

    # ---- bilinear summary projection: v[i] = sum_j Wb[i,j] s[j]  (= s @ Wb^T)
    v = jnp.dot(s, wbt, preferred_element_type=jnp.float32)            # (1, H)

    # ---- per-node scores on the VPU (multiply + lane reduce), no MXU / no .T
    sc1 = jnp.sum(h1 * v, axis=1, keepdims=True) + bb                  # (N, 1)
    sc2 = jnp.sum(h2 * v, axis=1, keepdims=True) + bb                  # (N, 1)

    out_ref[0] = jnp.concatenate([sc1, sc2], axis=0)                   # (2N, 1)


def dgi_forward(x_1, x_2, adj, params):
    """x_1, x_2: (B, N, F); adj: (B, N, N). Returns logits (B, 2N) float32."""
    B, N, F = x_1.shape
    H = params["w"].shape[1]

    # Host-side prep: stack branches along the node axis, cast the
    # bandwidth-dominant operands to bf16 (f32 accumulation inside the kernel).
    xcat = jnp.concatenate([x_1, x_2], axis=1).astype(jnp.bfloat16)    # (B,2N,F)
    adj_b = adj.astype(jnp.bfloat16)                                   # (B,N,N)
    w_b = params["w"].astype(jnp.bfloat16)                             # (F,H)
    gb2 = jnp.concatenate([params["gcn_bias"], params["gcn_bias"]], axis=1)
    wbt = params["bilinear_w"].T                                       # (H,H) f32

    # Advisory cost estimate for the XLA scheduler.
    flops = B * (2 * (2 * N) * F * H        # [x1;x2] @ W
                 + 2 * N * N * (2 * H)      # adj @ [z1|z2]
                 + 2 * H * H                # s @ Wb^T
                 + 4 * N * H)               # VPU score multiply + reduce
    bytes_accessed = int(xcat.size * 2 + adj_b.size * 2 + w_b.size * 2
                         + gb2.size * 4 + wbt.size * 4 + B * 2 * N * 4)

    # VMEM budget: double-buffered per-graph blocks + resident weights + slack,
    # clamped so the same setting is safe on v5e/v6e (128 MiB) and v7x (64 MiB).
    per_graph = 2 * N * F * 2 + N * N * 2 + 2 * N * 4
    resident = F * H * 2 + 2 * H * 4 + H * H * 4
    vmem_limit = int(min(max(2 * per_graph + resident + (4 << 20), 32 << 20),
                         48 << 20))

    out = pl.pallas_call(
        dgi_kernel,
        out_shape=jax.ShapeDtypeStruct((B, 2 * N, 1), jnp.float32),
        grid_spec=pltpu.PrefetchScalarGridSpec(
            num_scalar_prefetch=0,
            grid=(B,),
            in_specs=[
                pl.BlockSpec((1, 2 * N, F), lambda b: (b, 0, 0)),    # stacked x
                pl.BlockSpec((1, N, N), lambda b: (b, 0, 0)),        # adj
                pl.BlockSpec((F, H), lambda b: (0, 0)),              # GCN weight
                pl.BlockSpec((1, 2 * H), lambda b: (0, 0)),          # GCN bias x2
                pl.BlockSpec((H, H), lambda b: (0, 0)),              # bilinear W^T
                pl.BlockSpec(memory_space=pltpu.MemorySpace.SMEM),   # prelu alpha
                pl.BlockSpec(memory_space=pltpu.MemorySpace.SMEM),   # bilinear bias
            ],
            out_specs=pl.BlockSpec((1, 2 * N, 1), lambda b: (b, 0, 0)),
        ),
        compiler_params=pltpu.CompilerParams(
            dimension_semantics=("parallel",),
            vmem_limit_bytes=vmem_limit),
        cost_estimate=pl.CostEstimate(
            flops=flops, transcendentals=B * H,
            bytes_accessed=bytes_accessed),
    )(xcat, adj_b, w_b, gb2, wbt,
      params["prelu_alpha"], params["bilinear_b"])

    # torch.cat((sc_1, sc_2), dim=1)
    return out.reshape(B, 2 * N)


def dgi_reference(x_1, x_2, adj, params):
    """Pure-JAX reference with the same bf16-input / f32-accumulate numerics."""
    w = params["w"].astype(jnp.bfloat16)
    adj_b = adj.astype(jnp.bfloat16)
    gbias = params["gcn_bias"]                  # (1, H) f32
    alpha = params["prelu_alpha"][0, 0]
    wb = params["bilinear_w"]
    bb = params["bilinear_b"][0, 0]

    def gcn(x):
        z = jnp.einsum("bnf,fh->bnh", x.astype(jnp.bfloat16), w,
                       preferred_element_type=jnp.float32).astype(jnp.bfloat16)
        pre = jnp.einsum("bnm,bmh->bnh", adj_b, z,
                         preferred_element_type=jnp.float32) + gbias
        return jnp.where(pre > 0, pre, alpha * pre)

    h1 = gcn(x_1)
    h2 = gcn(x_2)
    s = jax.nn.sigmoid(jnp.mean(h1, axis=1))            # (B, H)
    v = jnp.einsum("ij,bj->bi", wb, s)                  # (B, H) = Wb @ s
    sc1 = jnp.einsum("bnh,bh->bn", h1, v) + bb
    sc2 = jnp.einsum("bnh,bh->bn", h2, v) + bb
    return jnp.concatenate([sc1, sc2], axis=1)


def init_params(key, nfeat, nhid):
    k1, k2, k3 = jax.random.split(key, 3)
    return {
        # nn.Linear(nfeat, nhid, bias=False).weight.T  -> (F, H)
        "w": jax.random.normal(k1, (nfeat, nhid), jnp.float32) * 0.1,
        # GCN bias (H,), stored as (1, H)
        "gcn_bias": jax.random.normal(k2, (1, nhid), jnp.float32) * 0.01,
        # nn.PReLU() default init weight = 0.25
        "prelu_alpha": jnp.full((1, 1), 0.25, jnp.float32),
        # nn.Bilinear(nhid, nhid, 1).weight[0]  -> (H, H)
        "bilinear_w": jax.random.normal(k3, (nhid, nhid), jnp.float32) * 0.1,
        # nn.Bilinear bias (1,), stored as (1, 1)
        "bilinear_b": jnp.zeros((1, 1), jnp.float32),
    }


if __name__ == "__main__":
    B, N, F, H = 2, 16, 32, 32
    key = jax.random.PRNGKey(0)
    kx1, kx2, ka, kp = jax.random.split(key, 4)

    x_1 = jax.random.normal(kx1, (B, N, F), jnp.float32)
    x_2 = jax.random.normal(kx2, (B, N, F), jnp.float32)

    # Symmetric, row-normalized adjacency (self-loops included), per graph.
    a = jax.random.uniform(ka, (B, N, N), jnp.float32)
    a = (a + jnp.swapaxes(a, 1, 2)) * 0.5 + jnp.eye(N)[None]
    adj = a / jnp.sum(a, axis=-1, keepdims=True)

    params = init_params(kp, F, H)

    score = dgi_forward(x_1, x_2, adj, params)
    score = jax.block_until_ready(score)

    ref = dgi_reference(x_1, x_2, adj, params)
    assert score.shape == (B, 2 * N)
    assert jnp.allclose(score, ref, atol=2e-3, rtol=2e-3), "mismatch vs JAX reference"

    print("KERNEL_OK")
</pallas_src>

<mosaic_0001>
module attributes {stable_mosaic.version = 11 : i64} {
  func.func @dgi_kernel(%arg0: i32, %arg1: memref<1x32x32xbf16, #tpu.memory_space<vmem>>, %arg2: memref<1x16x16xbf16, #tpu.memory_space<vmem>>, %arg3: memref<32x32xbf16, #tpu.memory_space<vmem>>, %arg4: memref<1x64xf32, #tpu.memory_space<vmem>>, %arg5: memref<32x32xf32, #tpu.memory_space<vmem>>, %arg6: memref<1x1xf32, #tpu.memory_space<smem>>, %arg7: memref<1x1xf32, #tpu.memory_space<smem>>, %arg8: memref<1x32x1xf32, #tpu.memory_space<vmem>>) attributes {dimension_semantics = [#tpu.dimension_semantics<parallel>], iteration_bounds = array<i64: 2>, scalar_prefetch = 0 : i64, scratch_operands = 0 : i64, tpu.core_type = #tpu.core_type<tc>, window_params = [{transform_indices = @transform_0, window_bounds = array<i64: 1, 32, 32>}, {transform_indices = @transform_1, window_bounds = array<i64: 1, 16, 16>}, {pipeline_mode = #tpu.pipeline_mode<synchronous>, transform_indices = @transform_2, window_bounds = array<i64: 32, 32>}, {pipeline_mode = #tpu.pipeline_mode<synchronous>, transform_indices = @transform_3, window_bounds = array<i64: 1, 64>}, {pipeline_mode = #tpu.pipeline_mode<synchronous>, transform_indices = @transform_4, window_bounds = array<i64: 32, 32>}, {transform_indices = @transform_5, window_bounds = array<i64: 1, 1>}, {transform_indices = @transform_6, window_bounds = array<i64: 1, 1>}, {transform_indices = @transform_7, window_bounds = array<i64: 1, 32, 1>}]} {
    %c0 = arith.constant 0 : index
    %c0_0 = arith.constant 0 : index
    %c0_1 = arith.constant 0 : index
    %0 = vector.load %arg1[%c0, %c0_0, %c0_1] : memref<1x32x32xbf16, #tpu.memory_space<vmem>>, vector<1x32x32xbf16>
    %1 = vector.shape_cast %0 : vector<1x32x32xbf16> to vector<32x32xbf16>
    %c0_2 = arith.constant 0 : index
    %c0_3 = arith.constant 0 : index
    %c0_4 = arith.constant 0 : index
    %2 = vector.load %arg2[%c0_2, %c0_3, %c0_4] : memref<1x16x16xbf16, #tpu.memory_space<vmem>>, vector<1x16x16xbf16>
    %3 = vector.shape_cast %2 : vector<1x16x16xbf16> to vector<16x16xbf16>
    %c0_5 = arith.constant 0 : index
    %c0_6 = arith.constant 0 : index
    %4 = vector.load %arg3[%c0_5, %c0_6] : memref<32x32xbf16, #tpu.memory_space<vmem>>, vector<32x32xbf16>
    %c0_7 = arith.constant 0 : index
    %c0_8 = arith.constant 0 : index
    %5 = vector.load %arg4[%c0_7, %c0_8] : memref<1x64xf32, #tpu.memory_space<vmem>>, vector<1x64xf32>
    %c0_9 = arith.constant 0 : index
    %c0_10 = arith.constant 0 : index
    %6 = vector.load %arg5[%c0_9, %c0_10] : memref<32x32xf32, #tpu.memory_space<vmem>>, vector<32x32xf32>
    %c0_11 = arith.constant 0 : index
    %c0_12 = arith.constant 0 : index
    %7 = memref.load %arg6[%c0_11, %c0_12] : memref<1x1xf32, #tpu.memory_space<smem>>
    %c0_13 = arith.constant 0 : index
    %c0_14 = arith.constant 0 : index
    %8 = memref.load %arg7[%c0_13, %c0_14] : memref<1x1xf32, #tpu.memory_space<smem>>
    %cst = arith.constant dense<0.000000e+00> : vector<32x32xf32>
    %9 = tpu.matmul %1, %4, %cst {dimension_numbers = #tpu.dot_dimension_numbers<[1], [0], [0], [1], [0, 0, 1, 1], [], []>} : vector<32x32xbf16>, vector<32x32xbf16>, vector<32x32xf32> -> vector<32x32xf32>
    %10 = vector.extract_strided_slice %9 {offsets = [0, 0], sizes = [16, 32], strides = [1, 1]} : vector<32x32xf32> to vector<16x32xf32>
    %11 = vector.extract_strided_slice %9 {offsets = [16, 0], sizes = [16, 32], strides = [1, 1]} : vector<32x32xf32> to vector<16x32xf32>
    %12 = tpu.concatenate %10, %11 in 1 : vector<16x32xf32>, vector<16x32xf32> -> vector<16x64xf32>
    %13 = arith.truncf %12 : vector<16x64xf32> to vector<16x64xbf16>
    %cst_15 = arith.constant dense<0.000000e+00> : vector<16x64xf32>
    %14 = tpu.matmul %3, %13, %cst_15 {dimension_numbers = #tpu.dot_dimension_numbers<[1], [0], [0], [1], [0, 0, 1, 1], [], []>} : vector<16x16xbf16>, vector<16x64xbf16>, vector<16x64xf32> -> vector<16x64xf32>
    %15 = vector.broadcast %5 : vector<1x64xf32> to vector<16x64xf32>
    %16 = arith.addf %14, %15 : vector<16x64xf32>
    %cst_16 = arith.constant 0.000000e+00 : f32
    %17 = vector.broadcast %cst_16 : f32 to vector<16x64xf32>
    %18 = arith.cmpf ogt, %16, %17 : vector<16x64xf32>
    %19 = vector.broadcast %7 : f32 to vector<16x64xf32>
    %20 = arith.mulf %19, %16 : vector<16x64xf32>
    %21 = arith.select %18, %16, %20 : vector<16x64xi1>, vector<16x64xf32>
    %22 = vector.extract_strided_slice %21 {offsets = [0, 0], sizes = [16, 32], strides = [1, 1]} : vector<16x64xf32> to vector<16x32xf32>
    %23 = vector.extract_strided_slice %21 {offsets = [0, 32], sizes = [16, 32], strides = [1, 1]} : vector<16x64xf32> to vector<16x32xf32>
    %cst_17 = arith.constant dense<0.000000e+00> : vector<32xf32>
    %24 = vector.multi_reduction <add>, %22, %cst_17 [0] : vector<16x32xf32> to vector<32xf32>
    %25 = vector.shape_cast %24 : vector<32xf32> to vector<1x32xf32>
    %cst_18 = arith.constant 1.600000e+01 : f32
    %26 = vector.broadcast %cst_18 : f32 to vector<1x32xf32>
    %27 = arith.divf %25, %26 : vector<1x32xf32>
    %28 = arith.negf %27 : vector<1x32xf32>
    %29 = math.exp %28 : vector<1x32xf32>
    %cst_19 = arith.constant 1.000000e+00 : f32
    %30 = vector.broadcast %cst_19 : f32 to vector<1x32xf32>
    %31 = arith.addf %30, %29 : vector<1x32xf32>
    %32 = arith.divf %30, %31 : vector<1x32xf32>
    %cst_20 = arith.constant dense<0.000000e+00> : vector<1x32xf32>
    %33 = tpu.matmul %32, %6, %cst_20 {dimension_numbers = #tpu.dot_dimension_numbers<[1], [0], [0], [1], [0, 0, 1, 1], [], []>} : vector<1x32xf32>, vector<32x32xf32>, vector<1x32xf32> -> vector<1x32xf32>
    %34 = vector.broadcast %33 : vector<1x32xf32> to vector<16x32xf32>
    %35 = arith.mulf %22, %34 : vector<16x32xf32>
    %cst_21 = arith.constant dense<0.000000e+00> : vector<16xf32>
    %36 = vector.multi_reduction <add>, %35, %cst_21 [1] : vector<16x32xf32> to vector<16xf32>
    %37 = vector.shape_cast %36 : vector<16xf32> to vector<16x1xf32>
    %38 = vector.broadcast %8 : f32 to vector<16x1xf32>
    %39 = arith.addf %37, %38 : vector<16x1xf32>
    %40 = vector.broadcast %33 : vector<1x32xf32> to vector<16x32xf32>
    %41 = arith.mulf %23, %40 : vector<16x32xf32>
    %cst_22 = arith.constant dense<0.000000e+00> : vector<16xf32>
    %42 = vector.multi_reduction <add>, %41, %cst_22 [1] : vector<16x32xf32> to vector<16xf32>
    %43 = vector.shape_cast %42 : vector<16xf32> to vector<16x1xf32>
    %44 = vector.broadcast %8 : f32 to vector<16x1xf32>
    %45 = arith.addf %43, %44 : vector<16x1xf32>
    %46 = tpu.concatenate %39, %45 in 0 : vector<16x1xf32>, vector<16x1xf32> -> vector<32x1xf32>
    %c0_23 = arith.constant 0 : index
    %c0_24 = arith.constant 0 : index
    %c0_25 = arith.constant 0 : index
    %47 = vector.load %arg8[%c0_23, %c0_24, %c0_25] : memref<1x32x1xf32, #tpu.memory_space<vmem>>, vector<1x32x1xf32>
    %48 = vector.shape_cast %47 : vector<1x32x1xf32> to vector<32x1xf32>
    %49 = vector.shape_cast %46 : vector<32x1xf32> to vector<1x32x1xf32>
    tpu.vector_store %arg8[%c0_23, %c0_24, %c0_25], %49 {strides = array<i32>} : memref<1x32x1xf32, #tpu.memory_space<vmem>>, vector<1x32x1xf32>,
    return
  }
  func.func @transform_0(%arg0: i32) -> (i32, i32, i32) {
    %c0_i32 = arith.constant 0 : i32
    %c0_i32_0 = arith.constant 0 : i32
    %c0_i32_1 = arith.constant 0 : i32
    return %arg0, %c0_i32, %c0_i32_0 : i32, i32, i32
  }
  func.func @transform_1(%arg0: i32) -> (i32, i32, i32) {
    %c0_i32 = arith.constant 0 : i32
    %c0_i32_0 = arith.constant 0 : i32
    %c0_i32_1 = arith.constant 0 : i32
    return %arg0, %c0_i32, %c0_i32_0 : i32, i32, i32
  }
  func.func @transform_2(%arg0: i32) -> (i32, i32) {
    %c0_i32 = arith.constant 0 : i32
    %c0_i32_0 = arith.constant 0 : i32
    %c0_i32_1 = arith.constant 0 : i32
    return %c0_i32, %c0_i32_0 : i32, i32
  }
  func.func @transform_3(%arg0: i32) -> (i32, i32) {
    %c0_i32 = arith.constant 0 : i32
    %c0_i32_0 = arith.constant 0 : i32
    %c0_i32_1 = arith.constant 0 : i32
    return %c0_i32, %c0_i32_0 : i32, i32
  }
  func.func @transform_4(%arg0: i32) -> (i32, i32) {
    %c0_i32 = arith.constant 0 : i32
    %c0_i32_0 = arith.constant 0 : i32
    %c0_i32_1 = arith.constant 0 : i32
    return %c0_i32, %c0_i32_0 : i32, i32
  }
  func.func @transform_5(%arg0: i32) -> (i32, i32) {
    %c0_i32 = arith.constant 0 : i32
    %c0_i32_0 = arith.constant 0 : i32
    %c0_i32_1 = arith.constant 0 : i32
    return %c0_i32, %c0_i32_0 : i32, i32
  }
  func.func @transform_6(%arg0: i32) -> (i32, i32) {
    %c0_i32 = arith.constant 0 : i32
    %c0_i32_0 = arith.constant 0 : i32
    %c0_i32_1 = arith.constant 0 : i32
    return %c0_i32, %c0_i32_0 : i32, i32
  }
  func.func @transform_7(%arg0: i32) -> (i32, i32, i32) {
    %c0_i32 = arith.constant 0 : i32
    %c0_i32_0 = arith.constant 0 : i32
    %c0_i32_1 = arith.constant 0 : i32
    return %arg0, %c0_i32, %c0_i32_0 : i32, i32, i32
  }
}

</mosaic_0001>

<llo_original>
// kernel: tpu_custom_call.1
$region0: #{tpu_custom_call.1}
  #allocation0 [shape = 'u32[]', space=smem, size = 0x4, offset = 0x4, fixed_abs, tag = 'smem constant byte address 0x4 - core index']
  #allocation1 [shape = 'u32[144,128]{1,0:T(1,128)}', space=vmem, size = 0x12000, scoped, tag = 'internal scratch']
  #allocation2 [shape = 'f32[1,1]{1,0:T(1,128)S(6)}', space=smem, size = 0x200, scoped, tag = 'scoped memory for tpu_custom_call.1']
  #allocation3 [shape = 'f32[1,1]{1,0:T(1,128)S(6)}', space=smem, size = 0x200, scoped, tag = 'scoped memory for tpu_custom_call.1']
  %s0 = inlined_call_operand.hbm [shape: bf16[2,32,32], index: 0, kind: input, shape index: {}]
  %s1 = inlined_call_operand.hbm [shape: bf16[2,16,16], index: 1, kind: input, shape index: {}]
  %s2 = inlined_call_operand.hbm [shape: bf16[32,32], index: 2, kind: input, shape index: {}]
  %s3 = inlined_call_operand.vmem [shape: f32[1,64], index: 3, kind: input, shape index: {}]
  %s4 = inlined_call_operand.hbm [shape: f32[32,32], index: 4, kind: input, shape index: {}]
  %s5 = inlined_call_operand.<no memory space> [shape: f32[1,1], index: 5, kind: input, shape index: {}]
  %s6 = inlined_call_operand.<no memory space> [shape: f32[1,1], index: 6, kind: input, shape index: {}]
  %s7 = inlined_call_operand.vmem [shape: f32[2,32,1], index: 7, kind: output, shape index: {}]
  %s8 = sld [smem:[#allocation0]]
  $region77: #{tpu_custom_call.1} parent=0
    _
  %s10 = ssub.s32 1, %s8
  %s11 = scalar_select 0, %s10, %s8
  %12 = sst [smem:[#allocation2]] %s5
  %13 = sst [smem:[#allocation3]] %s6
  $region1: #{tpu_custom_call.1} parent=0
    #allocation4 [shape = 'u8[16384]{0}', space=vmem, size = 0x4000, scoped, tag = 'input window, operand 0']
    #allocation5 [shape = 's32[2]{0}', space=sflag, size = 0x8, scoped, tag = 'scoped memory for tpu_custom_call.1']
    #allocation6 [shape = 'u8[8192]{0}', space=vmem, size = 0x2000, scoped, tag = 'input window, operand 1']
    #allocation7 [shape = 's32[2]{0}', space=sflag, size = 0x8, scoped, tag = 'scoped memory for tpu_custom_call.1']
    #allocation8 [shape = 'u8[8192]{0}', space=vmem, size = 0x2000, scoped, tag = 'input window, operand 2, single buffered']
    #allocation9 [shape = 'u8[16384]{0}', space=vmem, size = 0x4000, scoped, tag = 'input window, operand 4, single buffered']
    #allocation10 [shape = 's32[1]{0}', space=sflag, size = 0x4, scoped, tag = 'scoped memory for tpu_custom_call.1']
    %14 = vsyncpa [#allocation5], 0
    %s15 = scalar_lea.sflag [#allocation5], 1
    %16 = vsyncpa %s15, 0
    %17 = vsyncpa [#allocation7], 0
    %s18 = scalar_lea.sflag [#allocation7], 1
    %19 = vsyncpa %s18, 0
    %20 = vsyncpa [#allocation10], 0
    loop: start=0, step=1, limit=4
    $region2: #{tpu_custom_call.1} parent=1 // loop_pre_header
      _
    $region3: #{tpu_custom_call.1} parent=1 // loop_header
      %s22 = sphi 0, %s26
      %p23 = scmp.ge.s32.totalorder %s22, 4
      %s32 = sphi 0, %s34
      %s35 = sphi 0, %s32
      %s36 = sphi 0, %s35
      %s52 = sphi 0, %s36
      %s58 = sphi 0, %s60
      %s61 = sphi 0, %s58
      %s62 = sphi 0, %s61
      %s78 = sphi 0, %s62
      %s82 = sphi 0, %s82
      %s84 = sphi 0, %s82
      %s85 = sphi 0, %s84
      %s99 = sphi 0, %s85
      %s103 = sphi 0, %s103
      %s105 = sphi 0, %s103
      %s106 = sphi 0, %s105
      %s120 = sphi 0, %s106
      %s124 = sphi 0, %s124
      %s126 = sphi 0, %s124
      %s127 = sphi 0, %s126
      %s141 = sphi 0, %s127
      %s145 = sphi 0, %s145
      %s147 = sphi 0, %s145
      %s148 = sphi 0, %s147
      %s162 = sphi 0, %s148
      %s166 = sphi 0, %s166
      %s168 = sphi 0, %s166
      %s169 = sphi 0, %s168
      %s183 = sphi 0, %s169
      %s189 = sphi 0, %s191
      %s192 = sphi 0, %s189
      %s193 = sphi 0, %s192
      %s209 = sphi 0, %s193
    $region4: #{tpu_custom_call.1} parent=1 // loop_header_branch
      %25 = sbr.rel (%p23) target = $region8
    $region5: #{tpu_custom_call.1} parent=1 // loop_body
      %s27 = ssub.s32 %s22, 1
      %s28 = ssub.s32 %s22, 2
      %s29 = sadd.s32 %s22, 1
      %s30 = ssub.s32 %s22, %s29
      %p31 = scmp.eq.s32.totalorder %s30, 0
      %s33 = sadd.s32 %s32, 1
      %s34 = scalar_select %p31, %s32, %s33
      %p37 = pneg %p31
      %p38 = scmp.eq.s32.totalorder %s22, 1
      %p39 = por %p37, %p38
      %p40 = scmp.ne.s32.totalorder %s32, %s35
      %p41 = scmp.eq.s32.totalorder %s22, 0
      %p42 = por %p40, %p41
      %p43 = scmp.ne.s32.totalorder %s32, %s35
      %p44 = scmp.eq.s32.totalorder %s27, 1
      %p45 = por %p43, %p44
      %p46 = scmp.ne.s32.totalorder %s35, %s36
      %p47 = scmp.eq.s32.totalorder %s27, 0
      %p48 = por %p46, %p47
      %p49 = scmp.ne.s32.totalorder %s35, %s36
      %p50 = scmp.eq.s32.totalorder %s28, 1
      %p51 = por %p49, %p50
      %p53 = scmp.ne.s32.totalorder %s36, %s52
      %p54 = scmp.eq.s32.totalorder %s28, 0
      %p55 = por %p53, %p54
      %s56 = ssub.s32 %s22, %s29
      %p57 = scmp.eq.s32.totalorder %s56, 0
      %s59 = sadd.s32 %s58, 1
      %s60 = scalar_select %p57, %s58, %s59
      %p63 = pneg %p57
      %p64 = scmp.eq.s32.totalorder %s22, 1
      %p65 = por %p63, %p64
      %p66 = scmp.ne.s32.totalorder %s58, %s61
      %p67 = scmp.eq.s32.totalorder %s22, 0
      %p68 = por %p66, %p67
      %p69 = scmp.ne.s32.totalorder %s58, %s61
      %p70 = scmp.eq.s32.totalorder %s27, 1
      %p71 = por %p69, %p70
      %p72 = scmp.ne.s32.totalorder %s61, %s62
      %p73 = scmp.eq.s32.totalorder %s27, 0
      %p74 = por %p72, %p73
      %p75 = scmp.ne.s32.totalorder %s61, %s62
      %p76 = scmp.eq.s32.totalorder %s28, 1
      %p77 = por %p75, %p76
      %p79 = scmp.ne.s32.totalorder %s62, %s78
      %p80 = scmp.eq.s32.totalorder %s28, 0
      %p81 = por %p79, %p80
      %s83 = sadd.s32 %s82, 1
      %p86 = scmp.eq.s32.totalorder %s22, 1
      %p87 = scmp.ne.s32.totalorder %s82, %s84
      %p88 = scmp.eq.s32.totalorder %s22, 0
      %p89 = por %p87, %p88
      %p90 = scmp.ne.s32.totalorder %s82, %s84
      %p91 = scmp.eq.s32.totalorder %s27, 1
      %p92 = por %p90, %p91
      %p93 = scmp.ne.s32.totalorder %s84, %s85
      %p94 = scmp.eq.s32.totalorder %s27, 0
      %p95 = por %p93, %p94
      %p96 = scmp.ne.s32.totalorder %s84, %s85
      %p97 = scmp.eq.s32.totalorder %s28, 1
      %p98 = por %p96, %p97
      %p100 = scmp.ne.s32.totalorder %s85, %s99
      %p101 = scmp.eq.s32.totalorder %s28, 0
      %p102 = por %p100, %p101
      %s104 = sadd.s32 %s103, 1
      %p107 = scmp.eq.s32.totalorder %s22, 1
      %p108 = scmp.ne.s32.totalorder %s103, %s105
      %p109 = scmp.eq.s32.totalorder %s22, 0
      %p110 = por %p108, %p109
      %p111 = scmp.ne.s32.totalorder %s103, %s105
      %p112 = scmp.eq.s32.totalorder %s27, 1
      %p113 = por %p111, %p112
      %p114 = scmp.ne.s32.totalorder %s105, %s106
      %p115 = scmp.eq.s32.totalorder %s27, 0
      %p116 = por %p114, %p115
      %p117 = scmp.ne.s32.totalorder %s105, %s106
      %p118 = scmp.eq.s32.totalorder %s28, 1
      %p119 = por %p117, %p118
      %p121 = scmp.ne.s32.totalorder %s106, %s120
      %p122 = scmp.eq.s32.totalorder %s28, 0
      %p123 = por %p121, %p122
      %s125 = sadd.s32 %s124, 1
      %p128 = scmp.eq.s32.totalorder %s22, 1
      %p129 = scmp.ne.s32.totalorder %s124, %s126
      %p130 = scmp.eq.s32.totalorder %s22, 0
      %p131 = por %p129, %p130
      %p132 = scmp.ne.s32.totalorder %s124, %s126
      %p133 = scmp.eq.s32.totalorder %s27, 1
      %p134 = por %p132, %p133
      %p135 = scmp.ne.s32.totalorder %s126, %s127
      %p136 = scmp.eq.s32.totalorder %s27, 0
      %p137 = por %p135, %p136
      %p138 = scmp.ne.s32.totalorder %s126, %s127
      %p139 = scmp.eq.s32.totalorder %s28, 1
      %p140 = por %p138, %p139
      %p142 = scmp.ne.s32.totalorder %s127, %s141
      %p143 = scmp.eq.s32.totalorder %s28, 0
      %p144 = por %p142, %p143
      %s146 = sadd.s32 %s145, 1
      %p149 = scmp.eq.s32.totalorder %s22, 1
      %p150 = scmp.ne.s32.totalorder %s145, %s147
      %p151 = scmp.eq.s32.totalorder %s22, 0
      %p152 = por %p150, %p151
      %p153 = scmp.ne.s32.totalorder %s145, %s147
      %p154 = scmp.eq.s32.totalorder %s27, 1
      %p155 = por %p153, %p154
      %p156 = scmp.ne.s32.totalorder %s147, %s148
      %p157 = scmp.eq.s32.totalorder %s27, 0
      %p158 = por %p156, %p157
      %p159 = scmp.ne.s32.totalorder %s147, %s148
      %p160 = scmp.eq.s32.totalorder %s28, 1
      %p161 = por %p159, %p160
      %p163 = scmp.ne.s32.totalorder %s148, %s162
      %p164 = scmp.eq.s32.totalorder %s28, 0
      %p165 = por %p163, %p164
      %s167 = sadd.s32 %s166, 1
      %p170 = scmp.eq.s32.totalorder %s22, 1
      %p171 = scmp.ne.s32.totalorder %s166, %s168
      %p172 = scmp.eq.s32.totalorder %s22, 0
      %p173 = por %p171, %p172
      %p174 = scmp.ne.s32.totalorder %s166, %s168
      %p175 = scmp.eq.s32.totalorder %s27, 1
      %p176 = por %p174, %p175
      %p177 = scmp.ne.s32.totalorder %s168, %s169
      %p178 = scmp.eq.s32.totalorder %s27, 0
      %p179 = por %p177, %p178
      %p180 = scmp.ne.s32.totalorder %s168, %s169
      %p181 = scmp.eq.s32.totalorder %s28, 1
      %p182 = por %p180, %p181
      %p184 = scmp.ne.s32.totalorder %s169, %s183
      %p185 = scmp.eq.s32.totalorder %s28, 0
      %p186 = por %p184, %p185
      %s187 = ssub.s32 %s22, %s29
      %p188 = scmp.eq.s32.totalorder %s187, 0
      %s190 = sadd.s32 %s189, 1
      %s191 = scalar_select %p188, %s189, %s190
      %p194 = pneg %p188
      %p195 = scmp.eq.s32.totalorder %s22, 1
      %p196 = por %p194, %p195
      %p197 = scmp.ne.s32.totalorder %s189, %s192
      %p198 = scmp.eq.s32.totalorder %s22, 0
      %p199 = por %p197, %p198
      %p200 = scmp.ne.s32.totalorder %s189, %s192
      %p201 = scmp.eq.s32.totalorder %s27, 1
      %p202 = por %p200, %p201
      %p203 = scmp.ne.s32.totalorder %s192, %s193
      %p204 = scmp.eq.s32.totalorder %s27, 0
      %p205 = por %p203, %p204
      %p206 = scmp.ne.s32.totalorder %s192, %s193
      %p207 = scmp.eq.s32.totalorder %s28, 1
      %p208 = por %p206, %p207
      %p210 = scmp.ne.s32.totalorder %s193, %s209
      %p211 = scmp.eq.s32.totalorder %s28, 0
      %p212 = por %p210, %p211
      %p213 = scmp.le.s32.totalorder 1, %s22
      %p214 = scmp.lt.s32.totalorder %s22, 3
      %p215 = pnand %p213, %p214
      %p216 = pneg %p215
      // Predicated region
      $region9: #{tpu_custom_call.1} parent=5 // pred_check
        _
      $region10: #{tpu_custom_call.1} parent=5 // pred_check_branch
        %218 = sbr.rel (%p215) target = $region12
      $region11: #{tpu_custom_call.1} parent=5 // pred_region
        %s219 = ssub.s32 %s22, 1
        // Predicated region
        $region13: #{tpu_custom_call.1} parent=11 // pred_check
          %p220 = pneg %p95
        $region14: #{tpu_custom_call.1} parent=11 // pred_check_branch
          %222 = sbr.rel (%p220) target = $region16
        $region15: #{tpu_custom_call.1} parent=11 // pred_region
          %s224 = ssub.s32 256, 256
          %225 = vsyncadd [#allocation7], %s224
          %s226 = sshll.u32 [#allocation8], 4
          %s227 = int_to_ptr.vmem [resolvable:$true] %s226
          %232 = dma.hbm_to_vmem [thread:$0]  %s2, 256, %s227, [#allocation7], 64, 64, 4
        $region16: #{tpu_custom_call.1} parent=11 // pred_fallthru
          _
        // Predicated region
        $region17: #{tpu_custom_call.1} parent=11 // pred_check
          %p233 = pneg %p116
        $region18: #{tpu_custom_call.1} parent=11 // pred_check_branch
          %235 = sbr.rel (%p233) target = $region20
        $region19: #{tpu_custom_call.1} parent=11 // pred_region
          _
        $region20: #{tpu_custom_call.1} parent=11 // pred_fallthru
          _
        // Predicated region
        $region21: #{tpu_custom_call.1} parent=11 // pred_check
          %p236 = pneg %p137
        $region22: #{tpu_custom_call.1} parent=11 // pred_check_branch
          %238 = sbr.rel (%p236) target = $region24
        $region23: #{tpu_custom_call.1} parent=11 // pred_region
          %s240 = ssub.s32 512, 512
          %241 = vsyncadd [#allocation10], %s240
          %s242 = sshll.u32 [#allocation9], 4
          %s243 = int_to_ptr.vmem [resolvable:$true] %s242
          %248 = dma.hbm_to_vmem [thread:$0]  %s4, 512, %s243, [#allocation10], 128, 128, 8
        $region24: #{tpu_custom_call.1} parent=11 // pred_fallthru
          _
        // Predicated region
        $region25: #{tpu_custom_call.1} parent=11 // pred_check
          %p249 = pneg %p158
        $region26: #{tpu_custom_call.1} parent=11 // pred_check_branch
          %251 = sbr.rel (%p249) target = $region28
        $region27: #{tpu_custom_call.1} parent=11 // pred_region
          _
        $region28: #{tpu_custom_call.1} parent=11 // pred_fallthru
          _
        // Predicated region
        $region29: #{tpu_custom_call.1} parent=11 // pred_check
          %p252 = pneg %p179
        $region30: #{tpu_custom_call.1} parent=11 // pred_check_branch
          %254 = sbr.rel (%p252) target = $region32
        $region31: #{tpu_custom_call.1} parent=11 // pred_region
          _
        $region32: #{tpu_custom_call.1} parent=11 // pred_fallthru
          _
      $region12: #{tpu_custom_call.1} parent=5 // pred_fallthru
        _
      %p255 = scmp.lt.s32.totalorder %s22, 2
      // Predicated region
      $region33: #{tpu_custom_call.1} parent=5 // pred_check
        %p256 = pneg %p255
      $region34: #{tpu_custom_call.1} parent=5 // pred_check_branch
        %258 = sbr.rel (%p256) target = $region36
      $region35: #{tpu_custom_call.1} parent=5 // pred_region
        // Predicated region
        $region37: #{tpu_custom_call.1} parent=35 // pred_check
          %p259 = pneg %p42
        $region38: #{tpu_custom_call.1} parent=35 // pred_check_branch
          %261 = sbr.rel (%p259) target = $region40
        $region39: #{tpu_custom_call.1} parent=35 // pred_region
          %s262 = sand.u32 %s32, 1
          %s263 = scalar_lea.sflag [#allocation5], %s262
          %s264 = sand.u32 %s32, 1
          %s265 = smul.addr %s264, 16
          %s266 = scalar_lea.vmem [#allocation4], %s265
          %s268 = ssub.s32 256, 256
          %269 = vsyncadd %s263, %s268
          %s270 = smul.addr %s22, 4
          %s271 = smul.addr %s270, 64
          %s272 = scalar_lea.hbm %s0, %s271
          %s273 = sshll.u32 %s266, 4
          %s274 = int_to_ptr.vmem [resolvable:$true] %s273
          %279 = dma.hbm_to_vmem [thread:$0]  %s272, 256, %s274, %s263, 64, 64, 4
        $region40: #{tpu_custom_call.1} parent=35 // pred_fallthru
          _
        // Predicated region
        $region41: #{tpu_custom_call.1} parent=35 // pred_check
          %p280 = pneg %p68
        $region42: #{tpu_custom_call.1} parent=35 // pred_check_branch
          %282 = sbr.rel (%p280) target = $region44
        $region43: #{tpu_custom_call.1} parent=35 // pred_region
          %s283 = sand.u32 %s22, 1
          %s284 = scalar_lea.sflag [#allocation7], %s283
          %s285 = sand.u32 %s58, 1
          %s286 = smul.addr %s285, 8
          %s287 = scalar_lea.vmem [#allocation6], %s286
          %s289 = ssub.s32 128, 128
          %290 = vsyncadd %s284, %s289
          %s291 = smul.addr %s22, 2
          %s292 = smul.addr %s291, 64
          %s293 = scalar_lea.hbm %s1, %s292
          %s294 = sshll.u32 %s287, 4
          %s295 = int_to_ptr.vmem [resolvable:$true] %s294
          %300 = dma.hbm_to_vmem [thread:$0]  %s293, 128, %s295, %s284, 64, 64, 4
        $region44: #{tpu_custom_call.1} parent=35 // pred_fallthru
          _
      $region36: #{tpu_custom_call.1} parent=5 // pred_fallthru
        _
      %p301 = scmp.le.s32.totalorder 1, %s22
      %p302 = scmp.lt.s32.totalorder %s22, 3
      %p303 = pnand %p301, %p302
      %p304 = pneg %p303
      // Predicated region
      $region45: #{tpu_custom_call.1} parent=5 // pred_check
        _
      $region46: #{tpu_custom_call.1} parent=5 // pred_check_branch
        %306 = sbr.rel (%p303) target = $region48
      $region47: #{tpu_custom_call.1} parent=5 // pred_region
        %s307 = ssub.s32 %s22, 1
        %s308 = sand.u32 %s35, 1
        %s309 = scalar_lea.sflag [#allocation5], %s308
        %s310 = sand.u32 %s35, 1
        %s311 = smul.addr %s310, 16
        %s312 = scalar_lea.vmem [#allocation4], %s311
        // Predicated region
        $region49: #{tpu_custom_call.1} parent=47 // pred_check
          %p313 = pneg %p48
        $region50: #{tpu_custom_call.1} parent=47 // pred_check_branch
          %315 = sbr.rel (%p313) target = $region52
        $region51: #{tpu_custom_call.1} parent=47 // pred_region
          %316 = dma.done %s309, 256
        $region52: #{tpu_custom_call.1} parent=47 // pred_fallthru
          _
        %s317 = sand.u32 %s27, 1
        %s318 = scalar_lea.sflag [#allocation7], %s317
        %s319 = sand.u32 %s61, 1
        %s320 = smul.addr %s319, 8
        %s321 = scalar_lea.vmem [#allocation6], %s320
        // Predicated region
        $region53: #{tpu_custom_call.1} parent=47 // pred_check
          %p322 = pneg %p74
        $region54: #{tpu_custom_call.1} parent=47 // pred_check_branch
          %324 = sbr.rel (%p322) target = $region56
        $region55: #{tpu_custom_call.1} parent=47 // pred_region
          %325 = dma.done %s318, 128
        $region56: #{tpu_custom_call.1} parent=47 // pred_fallthru
          _
        // Predicated region
        $region57: #{tpu_custom_call.1} parent=47 // pred_check
          %p326 = pneg %p95
        $region58: #{tpu_custom_call.1} parent=47 // pred_check_branch
          %328 = sbr.rel (%p326) target = $region60
        $region59: #{tpu_custom_call.1} parent=47 // pred_region
          %329 = dma.done [#allocation7], 256
        $region60: #{tpu_custom_call.1} parent=47 // pred_fallthru
          _
        // Predicated region
        $region61: #{tpu_custom_call.1} parent=47 // pred_check
          %p330 = pneg %p137
        $region62: #{tpu_custom_call.1} parent=47 // pred_check_branch
          %332 = sbr.rel (%p330) target = $region64
        $region63: #{tpu_custom_call.1} parent=47 // pred_region
          %333 = dma.done [#allocation10], 512
        $region64: #{tpu_custom_call.1} parent=47 // pred_fallthru
          _
        %s334 = sand.u32 %s35, 1
        %s335 = scalar_lea.sflag [#allocation5], %s334
        %s336 = sand.u32 %s35, 1
        %s337 = smul.addr %s336, 16
        %s338 = scalar_lea.vmem [#allocation4], %s337
        %p339 = pneg %p48
        %p340 = pneg %p45
        %s341 = sand.u32 %s27, 1
        %s342 = scalar_lea.sflag [#allocation7], %s341
        %s343 = sand.u32 %s61, 1
        %s344 = smul.addr %s343, 8
        %s345 = scalar_lea.vmem [#allocation6], %s344
        %p346 = pneg %p74
        %p347 = pneg %p71
        %p348 = pneg %p95
        %p349 = pneg %p92
        %p350 = pneg %p116
        %p351 = pneg %p113
        %p352 = pneg %p137
        %p353 = pneg %p134
        %p354 = pneg %p158
        %p355 = pneg %p155
        %p356 = pneg %p179
        %p357 = pneg %p176
        %p358 = pneg %p205
        %p359 = pneg %p202
        %p360 = scmp.lt.s32.totalorder %s27, 1
        %s361 = scalar_select %p360, %s27, 1
        %s362 = smul.addr %s361, 4
        %s363 = smul.addr %s362, 8
        %s364 = scalar_lea.vmem %s7, %s363
        %p365 = scmp.lt.s32.totalorder %s27, 1
        %s366 = scalar_select %p365, %s27, 1
        %s367 = smul.addr %s366, 4
        %s368 = smul.addr %s367, 8
        %s369 = scalar_lea.vmem %s7, %s368
        %v371 = vld [vmem:[%s312] sm:$0xf]
        %v372 = vld [vmem:[%s312 + $0x4] sm:$0xf]
        %v373 = vld [vmem:[%s312 + $0x8] sm:$0xf]
        %v374 = vld [vmem:[%s312 + $0xc] sm:$0xf]
        %v375 = vld [vmem:[%s321] sm:$0xf]
        %v376 = vld [vmem:[%s321 + $0x4] sm:$0xf]
        %v377 = vld [vmem:[#allocation8] sm:$0xf]
        %v378 = vld [vmem:[#allocation8 + $0x4] sm:$0xf]
        %v379 = vld [vmem:[#allocation8 + $0x8] sm:$0xf]
        %v380 = vld [vmem:[#allocation8 + $0xc] sm:$0xf]
        %v381 = vld [vmem:[%s3] sm:$0x1]
        %v382 = vld [vmem:[#allocation9] sm:$0xff]
        %v383 = vld [vmem:[#allocation9 + $0x8] sm:$0xff]
        %v384 = vld [vmem:[#allocation9 + $0x10] sm:$0xff]
        %v385 = vld [vmem:[#allocation9 + $0x18] sm:$0xff]
        %s386 = sld [smem:[#allocation2]]
        %s387 = sld [smem:[#allocation3]]
        %v392 = vunpack.c.l.b16 %v371
        %v393 = vunpack.c.l.b16 %v372
        %v394 = vunpack.c.l.b16 %v373
        %v395 = vunpack.c.l.b16 %v374
        %v396 = vpack.c.b16 %v393, %v392
        %v397 = vpack.c.b16 %v395, %v394
        %v402 = vunpack.c.l.b16 %v377
        %v403 = vunpack.c.l.b16 %v378
        %v404 = vunpack.c.l.b16 %v379
        %v405 = vunpack.c.l.b16 %v380
        %v406 = vpack.c.b16 %v403, %v402
        %v407 = vpack.c.b16 %v405, %v404
        %vm410 = vcmask 261120
        %v412 = vsel %vm410, %v396, 0
        %v415 = vsel %vm410, %v397, 0
        %417 = vmatprep.subr.bf16.mxu0 0
        %418 = vmatpush1.bf16.msra.mxu0 0
        %419 = vmatprep.subr.bf16.mxu0 0
        %420 = vmatpush1.bf16.msra.mxu0 0
        %421 = vmatprep.subr.bf16.mxu0 0
        %422 = vmatpush1.bf16.msra.mxu0 0
        %423 = vmatprep.subr.bf16.mxu0 0
        %424 = vmatpush1.bf16.msra.mxu0 0
        %425 = vmatprep.subr.bf16.mxu0 0
        %426 = vmatpush1.bf16.msra.mxu0 0
        %427 = vmatprep.subr.bf16.mxu0 0
        %428 = vmatpush1.bf16.msra.mxu0 0
        %429 = vmatprep.subr.bf16.mxu0 0
        %430 = vmatpush1.bf16.msra.mxu0 %v407
        %431 = vmatprep.subr.bf16.mxu0 0
        %432 = vmatpush1.bf16.msra.mxu0 %v406
        %433 = vmatprep.subr.bf16.mxu0 0
        %434 = vmatpush2.bf16.msra.mxu0 0
        %435 = vmatprep.subr.bf16.mxu0 0
        %436 = vmatpush2.bf16.msra.mxu0 0
        %437 = vmatprep.subr.bf16.mxu0 0
        %438 = vmatpush2.bf16.msra.mxu0 0
        %439 = vmatprep.subr.bf16.mxu0 0
        %440 = vmatpush2.bf16.msra.mxu0 0
        %441 = vmatprep.subr.bf16.mxu0 0
        %442 = vmatpush2.bf16.msra.mxu0 0
        %443 = vmatprep.subr.bf16.mxu0 0
        %444 = vmatpush2.bf16.msra.mxu0 0
        %445 = vmatprep.subr.bf16.mxu0 0
        %446 = vmatpush2.bf16.msra.mxu0 0
        %447 = vmatprep.subr.bf16.mxu0 0
        %448 = vmatpush2.bf16.msra.mxu0 0
        %449 = vmatprep.mubr.bf16.mxu0 0
        %450 = vmatmul.mubr.bf16.gmra.mxu0 %v412
        %v451 = vpop.f32.mrf.mxu0
        %v452 = vadd.f32 0.0, %v451
        %v453 = vpop.f32.mrf.mxu0
        %v454 = vpop.f32.mrf.mxu0
        %v455 = vadd.f32 0.0, %v454
        %v456 = vpop.f32.mrf.mxu0
        %457 = vmatprep.mubr.bf16.mxu0 0
        %458 = vmatmul.mubr.bf16.gmra.mxu0 %v415
        %v459 = vpop.f32.mrf.mxu0
        %v460 = vadd.f32 0.0, %v459
        %v461 = vpop.f32.mrf.mxu0
        %v462 = vpop.f32.mrf.mxu0
        %v463 = vadd.f32 0.0, %v462
        %v464 = vpop.f32.mrf.mxu0
        %465 = vdwg.mxu0
        %468 = vrot.lane.b32.xlu0 %v460, 32
        %v469 = vpop.permute.xlu0 %468
        %470 = vrot.lane.b32.xlu0 %v463, 32
        %v471 = vpop.permute.xlu0 %470
        %v474 = vsel %vm410, %v452, %v469
        %v475 = vsel %vm410, %v455, %v471
        %v476 = vpack.c.bf16 %v475, %v474
        %v478 = vlaneseq
        %v479 = vshrl.u32 %v478, 7
        %v480 = vsub.s32 0, %v479
        %v481 = vrot.slane %v381, %v480
        %v485 = vunpack.c.l.b16 %v375
        %v486 = vunpack.c.l.b16 %v376
        %v487 = vpack.c.b16 %v486, %v485
        %vm488 = vcmask 130048
        %v490 = vsel %vm488, %v487, 0
        %492 = vmatprep.subr.bf16.mxu0 0
        %493 = vmatpush1.bf16.msra.mxu0 0
        %494 = vmatprep.subr.bf16.mxu0 0
        %495 = vmatpush1.bf16.msra.mxu0 0
        %496 = vmatprep.subr.bf16.mxu0 0
        %497 = vmatpush1.bf16.msra.mxu0 0
        %498 = vmatprep.subr.bf16.mxu0 0
        %499 = vmatpush1.bf16.msra.mxu0 0
        %500 = vmatprep.subr.bf16.mxu0 0
        %501 = vmatpush1.bf16.msra.mxu0 0
        %502 = vmatprep.subr.bf16.mxu0 0
        %503 = vmatpush1.bf16.msra.mxu0 0
        %504 = vmatprep.subr.bf16.mxu0 0
        %505 = vmatpush1.bf16.msra.mxu0 0
        %506 = vmatprep.subr.bf16.mxu0 0
        %507 = vmatpush1.bf16.msra.mxu0 %v476
        %508 = vmatprep.subr.bf16.mxu0 0
        %509 = vmatpush2.bf16.msra.mxu0 0
        %510 = vmatprep.subr.bf16.mxu0 0
        %511 = vmatpush2.bf16.msra.mxu0 0
        %512 = vmatprep.subr.bf16.mxu0 0
        %513 = vmatpush2.bf16.msra.mxu0 0
        %514 = vmatprep.subr.bf16.mxu0 0
        %515 = vmatpush2.bf16.msra.mxu0 0
        %516 = vmatprep.subr.bf16.mxu0 0
        %517 = vmatpush2.bf16.msra.mxu0 0
        %518 = vmatprep.subr.bf16.mxu0 0
        %519 = vmatpush2.bf16.msra.mxu0 0
        %520 = vmatprep.subr.bf16.mxu0 0
        %521 = vmatpush2.bf16.msra.mxu0 0
        %522 = vmatprep.subr.bf16.mxu0 0
        %523 = vmatpush2.bf16.msra.mxu0 0
        %524 = vmatprep.mubr.bf16.mxu0 0
        %525 = vmatmul.mubr.bf16.gmra.mxu0 %v490
        %v526 = vpop.f32.mrf.mxu0
        %v527 = vadd.f32 %v481, %v526
        %v528 = vpop.f32.mrf.mxu0
        %v529 = vpop.f32.mrf.mxu0
        %v530 = vadd.f32 %v481, %v529
        %v531 = vpop.f32.mrf.mxu0
        %532 = vdwg.mxu0
        %vm533 = vcmp.gt.f32.partialorder %v527, 0.0
        %vm534 = vcmp.gt.f32.partialorder %v530, 0.0
        %v535 = vstv %s386
        %v536 = vmul.f32 %v535, %v527
        %v537 = vmul.f32 %v535, %v530
        %v538 = vsel %vm533, %v527, %v536
        %v539 = vsel %vm534, %v530, %v537
        %v540 = vsel %vm410, %v538, 0.0
        %v541 = vsel %vm410, %v539, 0.0
        %v542 = vadd.f32 %v540, %v541
        %v543 = vrot.slane %v542, 4
        %v544 = vadd.f32 %v542, %v543
        %v545 = vrot.slane %v544, 2
        %v546 = vadd.f32 %v544, %v545
        %v547 = vrot.slane %v546, 1
        %v548 = vadd.f32 %v546, %v547
        %v549 = vrcp.pop 16.0
        %v550 = vmul.f32 %v548, %v549
        %v551 = vxor.u32 %v550, 2147483648
        %v552 = vmul.f32 %v551, 1.442695
        %v553 = vpow.pop %v552
        %v554 = vadd.f32 %v553, 1.0
        %v555 = vrcp.pop %v554
        %v556 = vmul.f32 1.0, %v555
        %v558 = vsel %vm410, %v556, 0
        %560 = vmatprep.subr.mxu0 0.0
        %561 = vmatpush1.msra.mxu0 0.0
        %562 = vmatprep.subr.mxu0 0.0
        %563 = vmatpush1.msra.mxu0 0.0
        %564 = vmatprep.subr.mxu0 0.0
        %565 = vmatpush1.msra.mxu0 0.0
        %566 = vmatprep.subr.mxu0 0.0
        %567 = vmatpush1.msra.mxu0 0.0
        %568 = vmatprep.subr.mxu0 0.0
        %569 = vmatpush1.msra.mxu0 0.0
        %570 = vmatprep.subr.mxu0 0.0
        %571 = vmatpush1.msra.mxu0 0.0
        %572 = vmatprep.subr.mxu0 0.0
        %573 = vmatpush1.msra.mxu0 0.0
        %574 = vmatprep.subr.mxu0 0.0
        %575 = vmatpush1.msra.mxu0 0.0
        %576 = vmatprep.subr.mxu0 0.0
        %577 = vmatpush1.msra.mxu0 0.0
        %578 = vmatprep.subr.mxu0 0.0
        %579 = vmatpush1.msra.mxu0 0.0
        %580 = vmatprep.subr.mxu0 0.0
        %581 = vmatpush1.msra.mxu0 0.0
        %582 = vmatprep.subr.mxu0 0.0
        %583 = vmatpush1.msra.mxu0 0.0
        %584 = vmatprep.subr.mxu0 0.0
        %585 = vmatpush1.msra.mxu0 %v385
        %586 = vmatprep.subr.mxu0 0.0
        %587 = vmatpush1.msra.mxu0 %v384
        %588 = vmatprep.subr.mxu0 0.0
        %589 = vmatpush1.msra.mxu0 %v383
        %590 = vmatprep.subr.mxu0 0.0
        %591 = vmatpush1.msra.mxu0 %v382
        %592 = vmatprep.subr.mxu0 0.0
        %593 = vmatpush2.msra.mxu0 0.0
        %594 = vmatprep.subr.mxu0 0.0
        %595 = vmatpush2.msra.mxu0 0.0
        %596 = vmatprep.subr.mxu0 0.0
        %597 = vmatpush2.msra.mxu0 0.0
        %598 = vmatprep.subr.mxu0 0.0
        %599 = vmatpush2.msra.mxu0 0.0
        %600 = vmatprep.subr.mxu0 0.0
        %601 = vmatpush2.msra.mxu0 0.0
        %602 = vmatprep.subr.mxu0 0.0
        %603 = vmatpush2.msra.mxu0 0.0
        %604 = vmatprep.subr.mxu0 0.0
        %605 = vmatpush2.msra.mxu0 0.0
        %606 = vmatprep.subr.mxu0 0.0
        %607 = vmatpush2.msra.mxu0 0.0
        %608 = vmatprep.subr.mxu0 0.0
        %609 = vmatpush2.msra.mxu0 0.0
        %610 = vmatprep.subr.mxu0 0.0
        %611 = vmatpush2.msra.mxu0 0.0
        %612 = vmatprep.subr.mxu0 0.0
        %613 = vmatpush2.msra.mxu0 0.0
        %614 = vmatprep.subr.mxu0 0.0
        %615 = vmatpush2.msra.mxu0 0.0
        %616 = vmatprep.subr.mxu0 0.0
        %617 = vmatpush2.msra.mxu0 0.0
        %618 = vmatprep.subr.mxu0 0.0
        %619 = vmatpush2.msra.mxu0 0.0
        %620 = vmatprep.subr.mxu0 0.0
        %621 = vmatpush2.msra.mxu0 0.0
        %622 = vmatprep.subr.mxu0 0.0
        %623 = vmatpush2.msra.mxu0 0.0
        %624 = vmatprep.mubr.f32.mxu0 0.0
        %625 = vmatmul.mubr.f32.gmra.mxu0 %v558
        %v626 = vpop.f32.mrf.mxu0
        %v627 = vadd.f32 0.0, %v626
        %v628 = vpop.f32.mrf.mxu0
        %629 = vdwg.mxu0
        %v630 = vlaneseq
        %v631 = vshrl.u32 %v630, 7
        %v632 = vsub.s32 0, %v631
        %v633 = vrot.slane %v627, %v632
        %v634 = vmul.f32 %v538, %v633
        %v635 = vmul.f32 %v539, %v633
        %v636 = vsel %vm410, %v634, 0.0
        %637 = vadd.xlane.f32.xlu0 %v636
        %v638 = vpop.xlane.xlu0 %637
        %v639 = vsel %vm410, %v635, 0.0
        %640 = vadd.xlane.f32.xlu0 %v639
        %v641 = vpop.xlane.xlu0 %640
        %v642 = vstv %s387
        %v643 = vadd.f32 %v638, %v642
        %v644 = vadd.f32 %v641, %v642
        %646 = vrot.lane.b32.xlu0 %v633, 32
        %v647 = vpop.permute.xlu0 %646
        %v649 = vmul.f32 %v538, %v647
        %v650 = vmul.f32 %v539, %v647
        %653 = vrot.lane.b32.xlu0 %v649, 96
        %v654 = vpop.permute.xlu0 %653
        %655 = vrot.lane.b32.xlu0 %v650, 96
        %v656 = vpop.permute.xlu0 %655
        %v659 = vsel %vm410, %v654, 0.0
        %660 = vadd.xlane.f32.xlu0 %v659
        %v661 = vpop.xlane.xlu0 %660
        %v662 = vsel %vm410, %v656, 0.0
        %663 = vadd.xlane.f32.xlu0 %v662
        %v664 = vpop.xlane.xlu0 %663
        %v665 = vadd.f32 %v661, %v642
        %v666 = vadd.f32 %v664, %v642
        %vm667 = vcmask 7168
        %668 = vst.msk [vmem:[%s369] sm:$0xff] %vm667, %v643
        %669 = vst.msk [vmem:[%s369 + $0x8] sm:$0xff] %vm667, %v644
        %670 = vst.msk [vmem:[%s369 + $0x10] sm:$0xff] %vm667, %v665
        %671 = vst.msk [vmem:[%s369 + $0x18] sm:$0xff] %vm667, %v666
        %p672 = scmp.lt.s32.totalorder %s27, 1
        %s673 = scalar_select %p672, %s27, 1
        %s674 = smul.addr %s673, 4
        %s675 = smul.addr %s674, 8
        %s676 = scalar_lea.vmem %s7, %s675
        // Predicated region
        $region65: #{tpu_custom_call.1} parent=47 // pred_check
          %p677 = pneg %p202
        $region66: #{tpu_custom_call.1} parent=47 // pred_check_branch
          %679 = sbr.rel (%p677) target = $region68
        $region67: #{tpu_custom_call.1} parent=47 // pred_region
          _
        $region68: #{tpu_custom_call.1} parent=47 // pred_fallthru
          _
      $region48: #{tpu_custom_call.1} parent=5 // pred_fallthru
        _
      %p680 = scmp.le.s32.totalorder 2, %s22
      // Predicated region
      $region69: #{tpu_custom_call.1} parent=5 // pred_check
        %p681 = pneg %p680
      $region70: #{tpu_custom_call.1} parent=5 // pred_check_branch
        %683 = sbr.rel (%p681) target = $region72
      $region71: #{tpu_custom_call.1} parent=5 // pred_region
        %s684 = ssub.s32 %s22, 2
        // Predicated region
        $region73: #{tpu_custom_call.1} parent=71 // pred_check
          %p685 = pneg %p208
        $region74: #{tpu_custom_call.1} parent=71 // pred_check_branch
          %687 = sbr.rel (%p685) target = $region76
        $region75: #{tpu_custom_call.1} parent=71 // pred_region
          %p688 = scmp.lt.s32.totalorder %s28, 1
          %s689 = scalar_select %p688, %s28, 1
          %s690 = smul.addr %s689, 4
          %s691 = smul.addr %s690, 8
          %s692 = scalar_lea.vmem %s7, %s691
        $region76: #{tpu_custom_call.1} parent=71 // pred_fallthru
          _
      $region72: #{tpu_custom_call.1} parent=5 // pred_fallthru
        _
    $region6: #{tpu_custom_call.1} parent=1 // loop_footer
      %s26 = sadd.s32 1, %s22
    $region7: #{tpu_custom_call.1} parent=1 // loop_footer_branch
      %21 = sbr.rel target = $region3
    $region8: #{tpu_custom_call.1} parent=1 // loop_exit
      _
    %693 = vsyncpa [#allocation5], 1
    %s694 = scalar_lea.sflag [#allocation5], 1
    %695 = vsyncpa %s694, 1
    %696 = vsyncpa [#allocation7], 1
    %s697 = scalar_lea.sflag [#allocation7], 1
    %698 = vsyncpa %s697, 1
    %699 = vsyncpa [#allocation10], 1

</llo_original>
